<compile_context>
chip_gen: v5e
topology: v5e:2x2
jax: 0.10.0
libtpu: 0.0.40
codegen_flags: <defaults>
</compile_context>

<pallas_src>
import functools

import jax
import jax.numpy as jnp
from jax.experimental import pallas as pl
from jax.experimental.pallas import tpu as pltpu


# ----------------------------------------------------------------------------
# Generation-aware hardware parameters
# ----------------------------------------------------------------------------
@functools.lru_cache(maxsize=1)
def _vmem_capacity_bytes() -> int:
    """Physical VMEM capacity; conservative 64 MiB (v7x) fallback."""
    try:
        info = pltpu.get_tpu_info()
        cap = getattr(info, "vmem_capacity_bytes", None)
        if cap:
            return int(cap)
    except Exception:
        pass
    return 64 * 1024 * 1024


@functools.lru_cache(maxsize=1)
def _weight_buffer_count() -> int:
    """3-deep weight pipeline on 128 MiB parts, 2-deep on 64 MiB (v7x)."""
    return 3 if _vmem_capacity_bytes() >= (100 << 20) else 2


@functools.lru_cache(maxsize=1)
def _streaming_budget_bytes() -> int:
    """~65% of VMEM for the streamed working set."""
    return int(0.65 * _vmem_capacity_bytes())


@functools.lru_cache(maxsize=1)
def _vmem_limit_cap_bytes() -> int:
    cap = _vmem_capacity_bytes()
    if cap >= (100 << 20):
        return 100 << 20                      # v5e / v6e: unlock most of 128 MiB
    return min(48 << 20, int(0.75 * cap))     # v7x: leave Mosaic scratch headroom


def _sublane_multiple(dtype) -> int:
    """Rows per full sublane tile: f32 -> 8, bf16 -> 16, int8 -> 32."""
    return max(8, 32 // jnp.dtype(dtype).itemsize)


def _pick_tn(H, FH_pad, n_buf, itemsize, budget_bytes, m_nominal=256):
    """Largest multiple-of-128 divisor of FH_pad whose streamed footprint fits
    the budget, preferring >= 2 tiles so megacore 'parallel' has work."""
    cands = [tn for tn in range(128, FH_pad + 1, 128) if FH_pad % tn == 0]
    if not cands:
        return FH_pad

    def footprint(tn):
        return (n_buf * H * tn * itemsize            # pipelined weight tiles
                + 2 * m_nominal * tn * itemsize      # double-buffered output tile
                + 2 * m_nominal * H * itemsize       # resident activation block
                + 8 * FH_pad * itemsize)             # resident bias (sublane padded)

    fitting = [tn for tn in cands if footprint(tn) <= budget_bytes]
    if not fitting:
        return cands[0]                              # 128: smallest streamable tile
    multi = [tn for tn in fitting if FH_pad // tn >= 2]
    return max(multi) if multi else max(fitting)


# ----------------------------------------------------------------------------
# Kernel
# ----------------------------------------------------------------------------
def _modulate_kernel(x_ref, w_ref, b_ref, o_ref):
    """o[:, jT:(j+1)T] = SiLU(x) @ W_tile[j] + b_tile[j].

    SiLU is recomputed per FH tile on purpose: the (M, H) block is tiny, the
    loop is DMA-bound (free VALU/EUP filler), and per-tile recompute keeps the
    kernel correct under megacore 'parallel' sharding of the grid axis.
    """
    j = pl.program_id(0)
    x = x_ref[...].astype(jnp.float32)
    act = (x * jax.nn.sigmoid(x)).astype(w_ref.dtype)   # SiLU in f32, matmul in native dtype
    y = jnp.dot(act, w_ref[0], preferred_element_type=jnp.float32)  # MXU, f32 accum
    y = y + b_ref[j].astype(jnp.float32)                            # resident bias, (1, TN)
    o_ref[...] = y.astype(o_ref.dtype)


def _weight_spec(H, TN, n_buf):
    if n_buf > 2:
        try:
            return pl.BlockSpec((1, H, TN), lambda j: (j, 0, 0),
                                pipeline_mode=pl.Buffered(n_buf))
        except TypeError:
            pass
    return pl.BlockSpec((1, H, TN), lambda j: (j, 0, 0))


@functools.partial(jax.jit, static_argnames=("fh_out",))
def _modulate_call(x, w_tiles, b_tiles, fh_out):
    """x: (M, H), w_tiles: (nt, H, TN) tile-major, b_tiles: (nt, 1, TN)."""
    M, H = x.shape
    nt, H2, TN = w_tiles.shape
    assert H == H2, "weight/input hidden-size mismatch"
    FH_pad = nt * TN
    out_dtype = x.dtype

    # Pad M so the LHS / output blocks fill whole sublane tiles for the dtype.
    sub = _sublane_multiple(out_dtype)
    M_pad = ((M + sub - 1) // sub) * sub
    if M_pad != M:
        x = jnp.pad(x, ((0, M_pad - M), (0, 0)))

    w_isz = jnp.dtype(w_tiles.dtype).itemsize
    x_isz = jnp.dtype(x.dtype).itemsize
    o_isz = jnp.dtype(out_dtype).itemsize
    n_buf = _weight_buffer_count()

    vmem_bytes = (n_buf * H * TN * w_isz            # pipelined weight tiles
                  + 2 * M_pad * TN * o_isz          # output tiles
                  + 2 * M_pad * H * x_isz           # resident activation
                  + 2 * nt * 8 * TN * w_isz)        # resident bias (sublane padded)
    vmem_limit = min(max(int(vmem_bytes * 1.3) + (4 << 20), 16 << 20),
                     _vmem_limit_cap_bytes())

    cost = pl.CostEstimate(
        flops=2 * M_pad * H * FH_pad,
        transcendentals=M_pad * H,
        bytes_accessed=(H * FH_pad + FH_pad) * w_isz
                       + M_pad * H * x_isz + M_pad * FH_pad * o_isz,
    )

    out = pl.pallas_call(
        _modulate_kernel,
        out_shape=jax.ShapeDtypeStruct((M_pad, FH_pad), out_dtype),
        grid=(nt,),
        in_specs=[
            pl.BlockSpec((M_pad, H), lambda j: (0, 0)),     # resident activation
            _weight_spec(H, TN, n_buf),                      # streamed contiguous weight tile
            pl.BlockSpec((nt, 1, TN), lambda j: (0, 0, 0)),  # resident bias (all tiles)
        ],
        out_specs=pl.BlockSpec((M_pad, TN), lambda j: (0, j)),
        compiler_params=pltpu.CompilerParams(
            dimension_semantics=("parallel",),   # v7x: shard FH tiles across both TCs
            vmem_limit_bytes=vmem_limit,
        ),
        cost_estimate=cost,
    )(x, w_tiles, b_tiles)

    return out[:M, :fh_out]


# ----------------------------------------------------------------------------
# Module
# ----------------------------------------------------------------------------
class ModulateDiTPallas:
    """JAX/Pallas port of ModulateDiT (act -> Linear(hidden, factor*hidden))."""

    def __init__(self, hidden_size: int, factor: int, key, dtype=jnp.float32):
        H = hidden_size
        FH = factor * hidden_size
        self.out_features = FH

        k_w, k_b = jax.random.split(key)
        # Deterministic non-zero init (reference module uses zeros_ -> trivially zero output).
        w = jax.random.normal(k_w, (FH, H), jnp.float32) * 0.02
        b = jax.random.normal(k_b, (FH,), jnp.float32) * 0.02

        itemsize = jnp.dtype(dtype).itemsize
        FH_pad = ((FH + 127) // 128) * 128
        TN = _pick_tn(H, FH_pad, _weight_buffer_count(), itemsize,
                      _streaming_budget_bytes())
        nt = FH_pad // TN
        self.tile_n = TN
        self.num_tiles = nt

        # Pad out-feature axis, then lay the weight out tile-major (nt, H, TN)
        # so each grid step's weight DMA is a single contiguous HBM block.
        w_t = jnp.zeros((H, FH_pad), jnp.float32).at[:, :FH].set(w.T)
        b_p = jnp.zeros((FH_pad,), jnp.float32).at[:FH].set(b)
        self.weight_tiles = jnp.asarray(
            w_t.reshape(H, nt, TN).transpose(1, 0, 2), dtype=dtype)
        self.bias_tiles = jnp.asarray(b_p.reshape(nt, 1, TN), dtype=dtype)

    def __call__(self, x, condition_type=None, token_replace_vec=None):
        if condition_type == "token_replace":
            if token_replace_vec is not None and token_replace_vec.shape == x.shape:
                # Fuse both passes so the weight is streamed from HBM only once.
                stacked = jnp.concatenate([x, token_replace_vec], axis=0)
                out = _modulate_call(stacked, self.weight_tiles, self.bias_tiles,
                                     self.out_features)
                B = x.shape[0]
                return out[:B], out[B:]
            x_out = _modulate_call(x, self.weight_tiles, self.bias_tiles,
                                   self.out_features)
            tr_out = _modulate_call(token_replace_vec, self.weight_tiles,
                                    self.bias_tiles, self.out_features)
            return x_out, tr_out
        return _modulate_call(x, self.weight_tiles, self.bias_tiles,
                              self.out_features)

    def dense_params(self):
        """(H, FH) weight and (FH,) bias reconstructed from tile-major storage
        (test/reference use only)."""
        nt, H, TN = self.weight_tiles.shape
        w_t = self.weight_tiles.transpose(1, 0, 2).reshape(H, nt * TN)[:, :self.out_features]
        b = self.bias_tiles.reshape(-1)[:self.out_features]
        return w_t, b


def _reference(x, w_t, b):
    xf = x.astype(jnp.float32)
    act = xf * jax.nn.sigmoid(xf)
    return jnp.dot(act, w_t.astype(jnp.float32),
                   precision=jax.lax.Precision.HIGHEST) + b.astype(jnp.float32)


if __name__ == "__main__":
    key = jax.random.PRNGKey(0)
    k_mod, k_x, k_tr, k_mod2, k_x2 = jax.random.split(key, 5)

    # ---- f32 module: aligned shapes, multi-tile grid (>= 2 tiles) ----------
    batch = 8
    hidden_size = 128
    factor = 6  # FH = 768 -> FH_pad = 768; >=2-tile rule gives TN <= 384 (grid >= 2)

    x32 = jax.random.normal(k_x, (batch, hidden_size), dtype=jnp.float32)
    tr32 = jax.random.normal(k_tr, (batch, hidden_size), dtype=jnp.float32)

    mod32 = ModulateDiTPallas(hidden_size, factor, k_mod, dtype=jnp.float32)
    assert mod32.num_tiles >= 2, "multi-tile / megacore path not exercised"
    w_ref32, b_ref32 = mod32.dense_params()

    y = jax.block_until_ready(mod32(x32))
    ref = _reference(x32, w_ref32, b_ref32)
    assert y.shape == (batch, factor * hidden_size)
    assert jnp.allclose(y, ref, rtol=1e-4, atol=1e-4)

    y2, y2_tr = mod32(x32, condition_type="token_replace", token_replace_vec=tr32)
    y2 = jax.block_until_ready(y2)
    y2_tr = jax.block_until_ready(y2_tr)
    ref_tr = _reference(tr32, w_ref32, b_ref32)
    assert jnp.allclose(y2, ref, rtol=1e-4, atol=1e-4)
    assert jnp.allclose(y2_tr, ref_tr, rtol=1e-4, atol=1e-4)

    # ---- bf16 module: native-dtype MXU path, M padded to 16 internally -----
    mod16 = ModulateDiTPallas(hidden_size, factor, k_mod, dtype=jnp.bfloat16)
    w_ref16, b_ref16 = mod16.dense_params()
    x16 = x32.astype(jnp.bfloat16)
    tr16 = tr32.astype(jnp.bfloat16)
    y16, y16_tr = mod16(x16, condition_type="token_replace", token_replace_vec=tr16)
    y16 = jax.block_until_ready(y16)
    y16_tr = jax.block_until_ready(y16_tr)
    ref16 = _reference(x16, w_ref16, b_ref16)
    ref16_tr = _reference(tr16, w_ref16, b_ref16)
    assert jnp.allclose(y16.astype(jnp.float32), ref16, rtol=5e-2, atol=3e-2)
    assert jnp.allclose(y16_tr.astype(jnp.float32), ref16_tr, rtol=5e-2, atol=3e-2)

    # ---- unaligned shapes: H=96, FH=576 (pads to 640), odd batch -----------
    batch_u, hidden_u, factor_u = 5, 96, 6
    xu = jax.random.normal(k_x2, (batch_u, hidden_u), dtype=jnp.float32)
    mod_u = ModulateDiTPallas(hidden_u, factor_u, k_mod2, dtype=jnp.float32)
    w_ref_u, b_ref_u = mod_u.dense_params()
    yu = jax.block_until_ready(mod_u(xu))
    ref_u = _reference(xu, w_ref_u, b_ref_u)
    assert yu.shape == (batch_u, factor_u * hidden_u)
    assert jnp.allclose(yu, ref_u, rtol=1e-4, atol=1e-4)

    print("KERNEL_OK")
</pallas_src>

<mosaic_0001>
module attributes {stable_mosaic.version = 11 : i64} {
  func.func @_modulate_kernel(%arg0: i32, %arg1: memref<8x128xf32, #tpu.memory_space<vmem>>, %arg2: memref<1x128x384xf32, #tpu.memory_space<vmem>>, %arg3: memref<2x1x384xf32, #tpu.memory_space<vmem>>, %arg4: memref<8x384xf32, #tpu.memory_space<vmem>>) attributes {dimension_semantics = [#tpu.dimension_semantics<parallel>], iteration_bounds = array<i64: 2>, scalar_prefetch = 0 : i64, scratch_operands = 0 : i64, tpu.core_type = #tpu.core_type<tc>, window_params = [{pipeline_mode = #tpu.pipeline_mode<synchronous>, transform_indices = @transform_0, window_bounds = array<i64: 8, 128>}, {transform_indices = @transform_1, window_bounds = array<i64: 1, 128, 384>}, {pipeline_mode = #tpu.pipeline_mode<synchronous>, transform_indices = @transform_2, window_bounds = array<i64: 2, 1, 384>}, {transform_indices = @transform_3, window_bounds = array<i64: 8, 384>}]} {
    %c0 = arith.constant 0 : index
    %c0_0 = arith.constant 0 : index
    %0 = vector.load %arg1[%c0, %c0_0] : memref<8x128xf32, #tpu.memory_space<vmem>>, vector<8x128xf32>
    %1 = arith.negf %0 : vector<8x128xf32>
    %2 = math.exp %1 : vector<8x128xf32>
    %cst = arith.constant 1.000000e+00 : f32
    %3 = vector.broadcast %cst : f32 to vector<8x128xf32>
    %4 = arith.addf %3, %2 : vector<8x128xf32>
    %5 = arith.divf %3, %4 : vector<8x128xf32>
    %6 = arith.mulf %0, %5 : vector<8x128xf32>
    %c0_1 = arith.constant 0 : index
    %c0_2 = arith.constant 0 : index
    %c0_3 = arith.constant 0 : index
    %7 = vector.load %arg2[%c0_1, %c0_2, %c0_3] : memref<1x128x384xf32, #tpu.memory_space<vmem>>, vector<1x128x384xf32>
    %8 = vector.shape_cast %7 : vector<1x128x384xf32> to vector<128x384xf32>
    %cst_4 = arith.constant dense<0.000000e+00> : vector<8x384xf32>
    %9 = tpu.matmul %6, %8, %cst_4 {dimension_numbers = #tpu.dot_dimension_numbers<[1], [0], [0], [1], [0, 0, 1, 1], [], []>} : vector<8x128xf32>, vector<128x384xf32>, vector<8x384xf32> -> vector<8x384xf32>
    %10 = arith.index_cast %arg0 : i32 to index
    %c0_5 = arith.constant 0 : index
    %c0_6 = arith.constant 0 : index
    %11 = vector.load %arg3[%10, %c0_5, %c0_6] : memref<2x1x384xf32, #tpu.memory_space<vmem>>, vector<1x1x384xf32>
    %12 = vector.shape_cast %11 : vector<1x1x384xf32> to vector<1x384xf32>
    %13 = vector.broadcast %12 : vector<1x384xf32> to vector<8x384xf32>
    %14 = arith.addf %9, %13 : vector<8x384xf32>
    %c0_7 = arith.constant 0 : index
    %c0_8 = arith.constant 0 : index
    %15 = vector.load %arg4[%c0_7, %c0_8] : memref<8x384xf32, #tpu.memory_space<vmem>>, vector<8x384xf32>
    tpu.vector_store %arg4[%c0_7, %c0_8], %14 {strides = array<i32>} : memref<8x384xf32, #tpu.memory_space<vmem>>, vector<8x384xf32>,
    return
  }
  func.func @transform_0(%arg0: i32) -> (i32, i32) {
    %c0_i32 = arith.constant 0 : i32
    %c0_i32_0 = arith.constant 0 : i32
    %c0_i32_1 = arith.constant 0 : i32
    return %c0_i32, %c0_i32_0 : i32, i32
  }
  func.func @transform_1(%arg0: i32) -> (i32, i32, i32) {
    %c0_i32 = arith.constant 0 : i32
    %c0_i32_0 = arith.constant 0 : i32
    %c0_i32_1 = arith.constant 0 : i32
    return %arg0, %c0_i32, %c0_i32_0 : i32, i32, i32
  }
  func.func @transform_2(%arg0: i32) -> (i32, i32, i32) {
    %c0_i32 = arith.constant 0 : i32
    %c0_i32_0 = arith.constant 0 : i32
    %c0_i32_1 = arith.constant 0 : i32
    %c0_i32_2 = arith.constant 0 : i32
    return %c0_i32, %c0_i32_0, %c0_i32_1 : i32, i32, i32
  }
  func.func @transform_3(%arg0: i32) -> (i32, i32) {
    %c0_i32 = arith.constant 0 : i32
    %c0_i32_0 = arith.constant 0 : i32
    return %c0_i32, %arg0 : i32, i32
  }
}

</mosaic_0001>

<llo_original>
// kernel: _modulate_call.1
$region0: #{_modulate_call.1}
  #allocation0 [shape = 'u32[]', space=smem, size = 0x4, offset = 0x4, fixed_abs, tag = 'smem constant byte address 0x4 - core index']
  #allocation1 [shape = 'u32[72,128]{1,0:T(1,128)}', space=vmem, size = 0x9000, scoped, tag = 'internal scratch']
  %s0 = inlined_call_operand.hbm [shape: f32[8,128], index: 0, kind: input, shape index: {}]
  %s1 = inlined_call_operand.hbm [shape: f32[2,128,384], index: 1, kind: input, shape index: {}]
  %s2 = inlined_call_operand.hbm [shape: f32[2,1,384], index: 2, kind: input, shape index: {}]
  %s3 = inlined_call_operand.hbm [shape: f32[8,768], index: 3, kind: output, shape index: {}]
  %s4 = sld [smem:[#allocation0]]
  $region57: #{_modulate_call.1} parent=0
    _
  %s6 = ssub.s32 1, %s4
  %s7 = scalar_select 0, %s6, %s4
  $region1: #{_modulate_call.1} parent=0
    #allocation2 [shape = 'u8[4096]{0}', space=vmem, size = 0x1000, scoped, tag = 'input window, operand 0, single buffered']
    #allocation3 [shape = 's32[2]{0}', space=sflag, size = 0x8, scoped, tag = 'scoped memory for _modulate_call.1']
    #allocation4 [shape = 's32[2]{0}', space=sflag, size = 0x8, scoped, tag = 'scoped memory for _modulate_call.1']
    #allocation5 [shape = 'u8[393216]{0}', space=vmem, size = 0x60000, scoped, tag = 'input window, operand 1']
    #allocation6 [shape = 's32[2]{0}', space=sflag, size = 0x8, scoped, tag = 'scoped memory for _modulate_call.1']
    #allocation7 [shape = 'u8[3072]{0}', space=vmem, size = 0xc00, scoped, tag = 'input window, operand 2, single buffered']
    #allocation8 [shape = 'u8[24576]{0}', space=vmem, size = 0x6000, scoped, tag = 'output window, operand 0']
    %8 = vsyncpa [#allocation3], 0
    %9 = vsyncpa [#allocation6], 0
    %s10 = scalar_lea.sflag [#allocation6], 1
    %11 = vsyncpa %s10, 0
    %12 = vsyncpa [#allocation4], 0
    %s13 = scalar_lea.sflag [#allocation4], 1
    %14 = vsyncpa %s13, 0
    loop: start=0, step=1, limit=4
    $region2: #{_modulate_call.1} parent=1 // loop_pre_header
      _
    $region3: #{_modulate_call.1} parent=1 // loop_header
      %s16 = sphi 0, %s20
      %p17 = scmp.ge.s32.totalorder %s16, 4
      %s24 = sphi 0, %s24
      %s26 = sphi 0, %s24
      %s27 = sphi 0, %s26
      %s41 = sphi 0, %s27
      %s47 = sphi 0, %s49
      %s50 = sphi 0, %s47
      %s51 = sphi 0, %s50
      %s67 = sphi 0, %s51
      %s71 = sphi 0, %s71
      %s73 = sphi 0, %s71
      %s74 = sphi 0, %s73
      %s88 = sphi 0, %s74
      %s94 = sphi 0, %s96
      %s97 = sphi 0, %s94
      %s98 = sphi 0, %s97
      %s114 = sphi 0, %s98
    $region4: #{_modulate_call.1} parent=1 // loop_header_branch
      %19 = sbr.rel (%p17) target = $region8
    $region5: #{_modulate_call.1} parent=1 // loop_body
      %s21 = ssub.s32 %s16, 1
      %s22 = ssub.s32 %s16, 2
      %s23 = sadd.s32 %s16, 1
      %s25 = sadd.s32 %s24, 1
      %p28 = scmp.eq.s32.totalorder %s16, 1
      %p29 = scmp.ne.s32.totalorder %s24, %s26
      %p30 = scmp.eq.s32.totalorder %s16, 0
      %p31 = por %p29, %p30
      %p32 = scmp.ne.s32.totalorder %s24, %s26
      %p33 = scmp.eq.s32.totalorder %s21, 1
      %p34 = por %p32, %p33
      %p35 = scmp.ne.s32.totalorder %s26, %s27
      %p36 = scmp.eq.s32.totalorder %s21, 0
      %p37 = por %p35, %p36
      %p38 = scmp.ne.s32.totalorder %s26, %s27
      %p39 = scmp.eq.s32.totalorder %s22, 1
      %p40 = por %p38, %p39
      %p42 = scmp.ne.s32.totalorder %s27, %s41
      %p43 = scmp.eq.s32.totalorder %s22, 0
      %p44 = por %p42, %p43
      %s45 = ssub.s32 %s16, %s23
      %p46 = scmp.eq.s32.totalorder %s45, 0
      %s48 = sadd.s32 %s47, 1
      %s49 = scalar_select %p46, %s47, %s48
      %p52 = pneg %p46
      %p53 = scmp.eq.s32.totalorder %s16, 1
      %p54 = por %p52, %p53
      %p55 = scmp.ne.s32.totalorder %s47, %s50
      %p56 = scmp.eq.s32.totalorder %s16, 0
      %p57 = por %p55, %p56
      %p58 = scmp.ne.s32.totalorder %s47, %s50
      %p59 = scmp.eq.s32.totalorder %s21, 1
      %p60 = por %p58, %p59
      %p61 = scmp.ne.s32.totalorder %s50, %s51
      %p62 = scmp.eq.s32.totalorder %s21, 0
      %p63 = por %p61, %p62
      %p64 = scmp.ne.s32.totalorder %s50, %s51
      %p65 = scmp.eq.s32.totalorder %s22, 1
      %p66 = por %p64, %p65
      %p68 = scmp.ne.s32.totalorder %s51, %s67
      %p69 = scmp.eq.s32.totalorder %s22, 0
      %p70 = por %p68, %p69
      %s72 = sadd.s32 %s71, 1
      %p75 = scmp.eq.s32.totalorder %s16, 1
      %p76 = scmp.ne.s32.totalorder %s71, %s73
      %p77 = scmp.eq.s32.totalorder %s16, 0
      %p78 = por %p76, %p77
      %p79 = scmp.ne.s32.totalorder %s71, %s73
      %p80 = scmp.eq.s32.totalorder %s21, 1
      %p81 = por %p79, %p80
      %p82 = scmp.ne.s32.totalorder %s73, %s74
      %p83 = scmp.eq.s32.totalorder %s21, 0
      %p84 = por %p82, %p83
      %p85 = scmp.ne.s32.totalorder %s73, %s74
      %p86 = scmp.eq.s32.totalorder %s22, 1
      %p87 = por %p85, %p86
      %p89 = scmp.ne.s32.totalorder %s74, %s88
      %p90 = scmp.eq.s32.totalorder %s22, 0
      %p91 = por %p89, %p90
      %s92 = ssub.s32 %s16, %s23
      %p93 = scmp.eq.s32.totalorder %s92, 0
      %s95 = sadd.s32 %s94, 1
      %s96 = scalar_select %p93, %s94, %s95
      %p99 = pneg %p93
      %p100 = scmp.eq.s32.totalorder %s16, 1
      %p101 = por %p99, %p100
      %p102 = scmp.ne.s32.totalorder %s94, %s97
      %p103 = scmp.eq.s32.totalorder %s16, 0
      %p104 = por %p102, %p103
      %p105 = scmp.ne.s32.totalorder %s94, %s97
      %p106 = scmp.eq.s32.totalorder %s21, 1
      %p107 = por %p105, %p106
      %p108 = scmp.ne.s32.totalorder %s97, %s98
      %p109 = scmp.eq.s32.totalorder %s21, 0
      %p110 = por %p108, %p109
      %p111 = scmp.ne.s32.totalorder %s97, %s98
      %p112 = scmp.eq.s32.totalorder %s22, 1
      %p113 = por %p111, %p112
      %p115 = scmp.ne.s32.totalorder %s98, %s114
      %p116 = scmp.eq.s32.totalorder %s22, 0
      %p117 = por %p115, %p116
      %p118 = scmp.le.s32.totalorder 1, %s16
      %p119 = scmp.lt.s32.totalorder %s16, 3
      %p120 = pnand %p118, %p119
      %p121 = pneg %p120
      // Predicated region
      $region9: #{_modulate_call.1} parent=5 // pred_check
        _
      $region10: #{_modulate_call.1} parent=5 // pred_check_branch
        %123 = sbr.rel (%p120) target = $region12
      $region11: #{_modulate_call.1} parent=5 // pred_region
        %s124 = ssub.s32 %s16, 1
        // Predicated region
        $region13: #{_modulate_call.1} parent=11 // pred_check
          %p125 = pneg %p37
        $region14: #{_modulate_call.1} parent=11 // pred_check_branch
          %127 = sbr.rel (%p125) target = $region16
        $region15: #{_modulate_call.1} parent=11 // pred_region
          %129 = vsyncadd [#allocation3], 0
          %s131 = sshll.u32 %s0, 4
          %s132 = int_to_ptr.hbm [resolvable:$true] %s131
          %s133 = sshll.u32 [#allocation2], 4
          %s134 = int_to_ptr.vmem [resolvable:$true] %s133
          %136 = dma.hbm_to_vmem [thread:$0]  %s132, 128, %s134, [#allocation3]
        $region16: #{_modulate_call.1} parent=11 // pred_fallthru
          _
        // Predicated region
        $region17: #{_modulate_call.1} parent=11 // pred_check
          %p137 = pneg %p84
        $region18: #{_modulate_call.1} parent=11 // pred_check_branch
          %139 = sbr.rel (%p137) target = $region20
        $region19: #{_modulate_call.1} parent=11 // pred_region
          %141 = vsyncadd [#allocation6], 0
          %s142 = sshll.u32 %s2, 4
          %s143 = int_to_ptr.hbm [resolvable:$true] %s142
          %s144 = sshll.u32 [#allocation7], 4
          %s145 = int_to_ptr.vmem [resolvable:$true] %s144
          %150 = dma.hbm_to_vmem [thread:$0]  %s143, 96, %s145, [#allocation6], 48, 48, 3
        $region20: #{_modulate_call.1} parent=11 // pred_fallthru
          _
      $region12: #{_modulate_call.1} parent=5 // pred_fallthru
        _
      %p151 = scmp.lt.s32.totalorder %s16, 2
      // Predicated region
      $region21: #{_modulate_call.1} parent=5 // pred_check
        %p152 = pneg %p151
      $region22: #{_modulate_call.1} parent=5 // pred_check_branch
        %154 = sbr.rel (%p152) target = $region24
      $region23: #{_modulate_call.1} parent=5 // pred_region
        // Predicated region
        $region25: #{_modulate_call.1} parent=23 // pred_check
          %p155 = pneg %p57
        $region26: #{_modulate_call.1} parent=23 // pred_check_branch
          %157 = sbr.rel (%p155) target = $region28
        $region27: #{_modulate_call.1} parent=23 // pred_region
          %s158 = sand.u32 %s16, 1
          %s159 = scalar_lea.sflag [#allocation6], %s158
          %s160 = sand.u32 %s47, 1
          %s161 = smul.addr %s160, 384
          %s162 = scalar_lea.vmem [#allocation5], %s161
          %164 = vsyncadd %s159, 0
          %s165 = smul.addr %s16, 48
          %s166 = smul.addr %s165, 8
          %s167 = scalar_lea.hbm %s1, %s166
          %s168 = sshll.u32 %s167, 4
          %s169 = int_to_ptr.hbm [resolvable:$true] %s168
          %s170 = sshll.u32 %s162, 4
          %s171 = int_to_ptr.vmem [resolvable:$true] %s170
          %176 = dma.hbm_to_vmem [thread:$0]  %s169, 6144, %s171, %s159, 384, 384, 24
        $region28: #{_modulate_call.1} parent=23 // pred_fallthru
          _
      $region24: #{_modulate_call.1} parent=5 // pred_fallthru
        _
      %p177 = scmp.le.s32.totalorder 1, %s16
      %p178 = scmp.lt.s32.totalorder %s16, 3
      %p179 = pnand %p177, %p178
      %p180 = pneg %p179
      // Predicated region
      $region29: #{_modulate_call.1} parent=5 // pred_check
        _
      $region30: #{_modulate_call.1} parent=5 // pred_check_branch
        %182 = sbr.rel (%p179) target = $region32
      $region31: #{_modulate_call.1} parent=5 // pred_region
        %s183 = ssub.s32 %s16, 1
        // Predicated region
        $region33: #{_modulate_call.1} parent=31 // pred_check
          %p184 = pneg %p37
        $region34: #{_modulate_call.1} parent=31 // pred_check_branch
          %186 = sbr.rel (%p184) target = $region36
        $region35: #{_modulate_call.1} parent=31 // pred_region
          %188 = dma.done [#allocation3], 128
        $region36: #{_modulate_call.1} parent=31 // pred_fallthru
          _
        %s189 = sand.u32 %s21, 1
        %s190 = scalar_lea.sflag [#allocation6], %s189
        %s191 = sand.u32 %s50, 1
        %s192 = smul.addr %s191, 384
        %s193 = scalar_lea.vmem [#allocation5], %s192
        // Predicated region
        $region37: #{_modulate_call.1} parent=31 // pred_check
          %p194 = pneg %p63
        $region38: #{_modulate_call.1} parent=31 // pred_check_branch
          %196 = sbr.rel (%p194) target = $region40
        $region39: #{_modulate_call.1} parent=31 // pred_region
          %198 = dma.done %s190, 6144
        $region40: #{_modulate_call.1} parent=31 // pred_fallthru
          _
        // Predicated region
        $region41: #{_modulate_call.1} parent=31 // pred_check
          %p199 = pneg %p84
        $region42: #{_modulate_call.1} parent=31 // pred_check_branch
          %201 = sbr.rel (%p199) target = $region44
        $region43: #{_modulate_call.1} parent=31 // pred_region
          %203 = dma.done [#allocation6], 96
        $region44: #{_modulate_call.1} parent=31 // pred_fallthru
          _
        %p204 = pneg %p37
        %p205 = pneg %p34
        %s206 = sand.u32 %s21, 1
        %s207 = scalar_lea.sflag [#allocation6], %s206
        %s208 = sand.u32 %s50, 1
        %s209 = smul.addr %s208, 384
        %s210 = scalar_lea.vmem [#allocation5], %s209
        %p211 = pneg %p63
        %p212 = pneg %p60
        %p213 = pneg %p84
        %p214 = pneg %p81
        %p215 = pneg %p110
        %p216 = pneg %p107
        %s217 = sand.u32 %s97, 1
        %s218 = scalar_lea.sflag [#allocation4], %s217
        %s219 = sand.u32 %s97, 1
        %s220 = smul.addr %s219, 24
        %s221 = scalar_lea.vmem [#allocation8], %s220
        %s222 = smul.u32 3, %s21
        %v223 = vld [vmem:[#allocation2] sm:$0xff]
        %v224 = vxor.u32 %v223, 2147483648
        %v225 = vmul.f32 %v224, 1.442695
        %v226 = vpow.pop %v225
        %v227 = vadd.f32 %v226, 1.0
        %v228 = vrcp.pop %v227
        %v229 = vmul.f32 %v227, %v228
        %v230 = vsub.f32 1.0, %v229
        %v231 = vmul.f32 %v228, %v230
        %v232 = vadd.f32 %v228, %v231
        %vm233 = vweird.f32 %v227
        %vm234 = vweird.f32 %v228
        %vm235 = vmor %vm233, %vm234
        %v236 = vsel %vm235, %v228, %v232
        %v237 = vand.u32 2147483647, %v227
        %vm238 = vcmp.eq.f32.partialorder %v237, 8.507059e+37
        %v239 = vand.u32 %v227, 2147483648
        %v240 = vor.u32 1.1754944e-38, %v239
        %v241 = vsel %vm238, %v240, %v236
        %v242 = vmul.f32 1.0, %v241
        %v243 = vmul.f32 %v223, %v242
        %v244 = vld [vmem:[%s193] sm:$0xff]
        %v245 = vld [vmem:[%s193 + $0x8] sm:$0xff]
        %v246 = vld [vmem:[%s193 + $0x10] sm:$0xff]
        %v247 = vld [vmem:[%s193 + $0x18] sm:$0xff]
        %v248 = vld [vmem:[%s193 + $0x20] sm:$0xff]
        %v249 = vld [vmem:[%s193 + $0x28] sm:$0xff]
        %v250 = vld [vmem:[%s193 + $0x30] sm:$0xff]
        %v251 = vld [vmem:[%s193 + $0x38] sm:$0xff]
        %v252 = vld [vmem:[%s193 + $0x40] sm:$0xff]
        %v253 = vld [vmem:[%s193 + $0x48] sm:$0xff]
        %v254 = vld [vmem:[%s193 + $0x50] sm:$0xff]
        %v255 = vld [vmem:[%s193 + $0x58] sm:$0xff]
        %v256 = vld [vmem:[%s193 + $0x60] sm:$0xff]
        %v257 = vld [vmem:[%s193 + $0x68] sm:$0xff]
        %v258 = vld [vmem:[%s193 + $0x70] sm:$0xff]
        %v259 = vld [vmem:[%s193 + $0x78] sm:$0xff]
        %v260 = vld [vmem:[%s193 + $0x80] sm:$0xff]
        %v261 = vld [vmem:[%s193 + $0x88] sm:$0xff]
        %v262 = vld [vmem:[%s193 + $0x90] sm:$0xff]
        %v263 = vld [vmem:[%s193 + $0x98] sm:$0xff]
        %v264 = vld [vmem:[%s193 + $0xa0] sm:$0xff]
        %v265 = vld [vmem:[%s193 + $0xa8] sm:$0xff]
        %v266 = vld [vmem:[%s193 + $0xb0] sm:$0xff]
        %v267 = vld [vmem:[%s193 + $0xb8] sm:$0xff]
        %v268 = vld [vmem:[%s193 + $0xc0] sm:$0xff]
        %v269 = vld [vmem:[%s193 + $0xc8] sm:$0xff]
        %v270 = vld [vmem:[%s193 + $0xd0] sm:$0xff]
        %v271 = vld [vmem:[%s193 + $0xd8] sm:$0xff]
        %v272 = vld [vmem:[%s193 + $0xe0] sm:$0xff]
        %v273 = vld [vmem:[%s193 + $0xe8] sm:$0xff]
        %v274 = vld [vmem:[%s193 + $0xf0] sm:$0xff]
        %v275 = vld [vmem:[%s193 + $0xf8] sm:$0xff]
        %v276 = vld [vmem:[%s193 + $0x100] sm:$0xff]
        %v277 = vld [vmem:[%s193 + $0x108] sm:$0xff]
        %v278 = vld [vmem:[%s193 + $0x110] sm:$0xff]
        %v279 = vld [vmem:[%s193 + $0x118] sm:$0xff]
        %v280 = vld [vmem:[%s193 + $0x120] sm:$0xff]
        %v281 = vld [vmem:[%s193 + $0x128] sm:$0xff]
        %v282 = vld [vmem:[%s193 + $0x130] sm:$0xff]
        %v283 = vld [vmem:[%s193 + $0x138] sm:$0xff]
        %v284 = vld [vmem:[%s193 + $0x140] sm:$0xff]
        %v285 = vld [vmem:[%s193 + $0x148] sm:$0xff]
        %v286 = vld [vmem:[%s193 + $0x150] sm:$0xff]
        %v287 = vld [vmem:[%s193 + $0x158] sm:$0xff]
        %v288 = vld [vmem:[%s193 + $0x160] sm:$0xff]
        %v289 = vld [vmem:[%s193 + $0x168] sm:$0xff]
        %v290 = vld [vmem:[%s193 + $0x170] sm:$0xff]
        %v291 = vld [vmem:[%s193 + $0x178] sm:$0xff]
        %s292 = smul.u32 %s21, 3
        %s293 = scalar_lea.vmem [#allocation7], %s292
        %v294 = vld [vmem:[%s293] sm:$0x7]
        %v296 = vperm.slane %v294, 0
        %v297 = vperm.slane %v294, 1
        %v298 = vperm.slane %v294, 2
        %302 = vmatpush.msra.mxu0 %v289
        %303 = vmatpush.msra.mxu0 %v286
        %304 = vmatpush.msra.mxu0 %v283
        %305 = vmatpush.msra.mxu0 %v280
        %306 = vmatpush.msra.mxu0 %v277
        %307 = vmatpush.msra.mxu0 %v274
        %308 = vmatpush.msra.mxu0 %v271
        %309 = vmatpush.msra.mxu0 %v268
        %310 = vmatpush.msra.mxu0 %v265
        %311 = vmatpush.msra.mxu0 %v262
        %312 = vmatpush.msra.mxu0 %v259
        %313 = vmatpush.msra.mxu0 %v256
        %314 = vmatpush.msra.mxu0 %v253
        %315 = vmatpush.msra.mxu0 %v250
        %316 = vmatpush.msra.mxu0 %v247
        %317 = vmatpush.msra.mxu0 %v244
        %318 = vmatmul.f32.gmra.mxu0 %v243
        %v319 = vpop.f32.mrf.mxu0
        %v320 = vadd.f32 %v296, %v319
        %321 = vdwg.mxu0
        %322 = vmatpush.msra.mxu0 %v290
        %323 = vmatpush.msra.mxu0 %v287
        %324 = vmatpush.msra.mxu0 %v284
        %325 = vmatpush.msra.mxu0 %v281
        %326 = vmatpush.msra.mxu0 %v278
        %327 = vmatpush.msra.mxu0 %v275
        %328 = vmatpush.msra.mxu0 %v272
        %329 = vmatpush.msra.mxu0 %v269
        %330 = vmatpush.msra.mxu0 %v266
        %331 = vmatpush.msra.mxu0 %v263
        %332 = vmatpush.msra.mxu0 %v260
        %333 = vmatpush.msra.mxu0 %v257
        %334 = vmatpush.msra.mxu0 %v254
        %335 = vmatpush.msra.mxu0 %v251
        %336 = vmatpush.msra.mxu0 %v248
        %337 = vmatpush.msra.mxu0 %v245
        %338 = vmatmul.f32.gmra.mxu0 %v243
        %v339 = vpop.f32.mrf.mxu0
        %v340 = vadd.f32 %v297, %v339
        %341 = vdwg.mxu0
        %342 = vmatpush.msra.mxu0 %v291
        %343 = vmatpush.msra.mxu0 %v288
        %344 = vmatpush.msra.mxu0 %v285
        %345 = vmatpush.msra.mxu0 %v282
        %346 = vmatpush.msra.mxu0 %v279
        %347 = vmatpush.msra.mxu0 %v276
        %348 = vmatpush.msra.mxu0 %v273
        %349 = vmatpush.msra.mxu0 %v270
        %350 = vmatpush.msra.mxu0 %v267
        %351 = vmatpush.msra.mxu0 %v264
        %352 = vmatpush.msra.mxu0 %v261
        %353 = vmatpush.msra.mxu0 %v258
        %354 = vmatpush.msra.mxu0 %v255
        %355 = vmatpush.msra.mxu0 %v252
        %356 = vmatpush.msra.mxu0 %v249
        %357 = vmatpush.msra.mxu0 %v246
        %358 = vmatmul.f32.gmra.mxu0 %v243
        %v359 = vpop.f32.mrf.mxu0
        %v360 = vadd.f32 %v298, %v359
        %361 = vdwg.mxu0
        %362 = vst [vmem:[%s221] sm:$0xff] %v320
        %363 = vst [vmem:[%s221 + $0x8] sm:$0xff] %v340
        %364 = vst [vmem:[%s221 + $0x10] sm:$0xff] %v360
        %s365 = sand.u32 %s97, 1
        %s366 = scalar_lea.sflag [#allocation4], %s365
        %s367 = sand.u32 %s97, 1
        %s368 = smul.addr %s367, 24
        %s369 = scalar_lea.vmem [#allocation8], %s368
        // Predicated region
        $region45: #{_modulate_call.1} parent=31 // pred_check
          %p370 = pneg %p107
        $region46: #{_modulate_call.1} parent=31 // pred_check_branch
          %372 = sbr.rel (%p370) target = $region48
        $region47: #{_modulate_call.1} parent=31 // pred_region
          %s373 = smul.u32 3, %s21
          %375 = vsyncadd %s366, 0
          %s376 = smul.addr %s373, 8
          %s377 = scalar_lea.hbm %s3, %s376
          %s379 = sshll.u32 %s369, 4
          %s380 = int_to_ptr.vmem [resolvable:$true] %s379
          %s381 = sshll.u32 %s377, 4
          %s382 = int_to_ptr.hbm [resolvable:$true] %s381
          %384 = dma.vmem_to_hbm [thread:$0]  %s380, 384, %s382, %s366
        $region48: #{_modulate_call.1} parent=31 // pred_fallthru
          _
      $region32: #{_modulate_call.1} parent=5 // pred_fallthru
        _
      %p385 = scmp.le.s32.totalorder 2, %s16
      // Predicated region
      $region49: #{_modulate_call.1} parent=5 // pred_check
        %p386 = pneg %p385
      $region50: #{_modulate_call.1} parent=5 // pred_check_branch
        %388 = sbr.rel (%p386) target = $region52
      $region51: #{_modulate_call.1} parent=5 // pred_region
        %s389 = ssub.s32 %s16, 2
        // Predicated region
        $region53: #{_modulate_call.1} parent=51 // pred_check
          %p390 = pneg %p113
        $region54: #{_modulate_call.1} parent=51 // pred_check_branch
          %392 = sbr.rel (%p390) target = $region56
        $region55: #{_modulate_call.1} parent=51 // pred_region
          %s393 = sand.u32 %s98, 1
          %s394 = scalar_lea.sflag [#allocation4], %s393
          %s395 = sand.u32 %s98, 1
          %s396 = smul.addr %s395, 24
          %s397 = scalar_lea.vmem [#allocation8], %s396
          %399 = dma.done %s394, 384
        $region56: #{_modulate_call.1} parent=51 // pred_fallthru
          _
      $region52: #{_modulate_call.1} parent=5 // pred_fallthru
        _
    $region6: #{_modulate_call.1} parent=1 // loop_footer
      %s20 = sadd.s32 1, %s16
    $region7: #{_modulate_call.1} parent=1 // loop_footer_branch
      %15 = sbr.rel target = $region3
    $region8: #{_modulate_call.1} parent=1 // loop_exit
      _
    %400 = vsyncpa [#allocation3], 1
    %s401 = scalar_lea.sflag [#allocation3], 1
    %402 = vsyncpa %s401, 1
    %403 = vsyncpa [#allocation6], 1
    %s404 = scalar_lea.sflag [#allocation6], 1
    %405 = vsyncpa %s404, 1
    %406 = vsyncpa [#allocation4], 1
    %s407 = scalar_lea.sflag [#allocation4], 1
    %408 = vsyncpa %s407, 1

</llo_original>
